<compile_context>
chip_gen: v7x
topology: tpu7x:2x2x1
jax: 0.10.0
libtpu: 0.0.40
codegen_flags: <defaults>
</compile_context>

<pallas_src>
import functools

import jax
import jax.numpy as jnp
from jax.experimental import pallas as pl
from jax.experimental.pallas import tpu as pltpu

_LANES = 128


def _affine_sigmoid(xt, w_ref, b_ref):
    """xt: (IN, TB) f32 block (features on sublanes, batch on lanes)."""
    in_features = xt.shape[0]
    z = xt[0:1, :] * w_ref[0]
    for k in range(1, in_features):        # IN == 3: unrolled at trace time, pure VPU FMAs
        z = z + xt[k:k + 1, :] * w_ref[k]
    z = z + b_ref[0]
    return 1.0 / (1.0 + jnp.exp(-z))       # exact sigmoid (exp rides the EUP slot)


def _fwd_kernel(xt_ref, w_ref, b_ref, o_ref):
    o_ref[...] = _affine_sigmoid(xt_ref[...], w_ref, b_ref).astype(o_ref.dtype)


def _fwd_loss_kernel(xt_ref, yt_ref, w_ref, b_ref, o_ref, loss_ref, acc_ref, *, batch):
    i = pl.program_id(0)
    tb = o_ref.shape[1]

    @pl.when(i == 0)
    def _():
        acc_ref[...] = jnp.zeros_like(acc_ref)

    y_pred = _affine_sigmoid(xt_ref[...], w_ref, b_ref)
    o_ref[...] = y_pred.astype(o_ref.dtype)

    # Mask out lanes that are batch padding so they don't pollute the loss.
    lane = jax.lax.broadcasted_iota(jnp.int32, y_pred.shape, 1) + i * tb
    diff = jnp.where(lane < batch, y_pred - yt_ref[...], 0.0)
    acc_ref[...] += jnp.sum(diff * diff, keepdims=True)
    # Same (1,1) output block every step -> resident in VMEM, single HBM writeback at the end.
    loss_ref[...] = (acc_ref[...] / batch).astype(loss_ref.dtype)


def _block_lanes(batch, max_block_lanes):
    tb = min(max_block_lanes, _LANES * pl.cdiv(batch, _LANES))
    padded = tb * pl.cdiv(batch, tb)
    return tb, padded


def _to_lane_major(x, y, padded):
    """(B, IN) -> (IN, Bp); (B, 1) -> (1, Bp); zero-padded on the batch (lane) axis."""
    b = x.shape[0]
    xt = jnp.pad(x.T, ((0, 0), (0, padded - b)))
    yt = None if y is None else jnp.pad(y.reshape(1, b), ((0, 0), (0, padded - b)))
    return xt, yt


def linear_sigmoid(x, w, b, *, max_block_lanes=32768):
    """x: (B, IN) f32, w: (IN,) f32, b: (1,) f32 -> sigmoid(x @ w + b), shape (B, 1)."""
    batch, in_features = x.shape
    tb, padded = _block_lanes(batch, max_block_lanes)
    xt, _ = _to_lane_major(x, None, padded)

    out = pl.pallas_call(
        _fwd_kernel,
        out_shape=jax.ShapeDtypeStruct((1, padded), jnp.float32),
        grid=(padded // tb,),
        in_specs=[
            pl.BlockSpec((in_features, tb), lambda i: (0, i)),    # x^T block, VMEM
            pl.BlockSpec(memory_space=pltpu.MemorySpace.SMEM),    # w (3 scalars)
            pl.BlockSpec(memory_space=pltpu.MemorySpace.SMEM),    # b (1 scalar)
        ],
        out_specs=pl.BlockSpec((1, tb), lambda i: (0, i)),        # lane-dense output
        compiler_params=pltpu.CompilerParams(dimension_semantics=("parallel",)),
    )(xt, w, b)
    return out[0, :batch].reshape(batch, 1)


def linear_sigmoid_mse(x, y, w, b, *, max_block_lanes=32768):
    """Fused forward + MSE loss. Returns (y_pred (B,1), scalar loss)."""
    batch, in_features = x.shape
    tb, padded = _block_lanes(batch, max_block_lanes)
    xt, yt = _to_lane_major(x, y, padded)

    y_pred, loss = pl.pallas_call(
        functools.partial(_fwd_loss_kernel, batch=batch),
        out_shape=(
            jax.ShapeDtypeStruct((1, padded), jnp.float32),
            jax.ShapeDtypeStruct((1, 1), jnp.float32),
        ),
        grid=(padded // tb,),
        in_specs=[
            pl.BlockSpec((in_features, tb), lambda i: (0, i)),    # x^T block
            pl.BlockSpec((1, tb), lambda i: (0, i)),              # y target block (lane-dense)
            pl.BlockSpec(memory_space=pltpu.MemorySpace.SMEM),    # w
            pl.BlockSpec(memory_space=pltpu.MemorySpace.SMEM),    # b
        ],
        out_specs=(
            pl.BlockSpec((1, tb), lambda i: (0, i)),              # y_pred, lane-dense
            pl.BlockSpec((1, 1), lambda i: (0, 0)),               # scalar loss (resident block)
        ),
        scratch_shapes=[pltpu.VMEM((1, 1), jnp.float32)],         # running sum of squared error
        # Cross-step accumulator => reduction axis must be "arbitrary".
        compiler_params=pltpu.CompilerParams(dimension_semantics=("arbitrary",)),
    )(xt, yt, w, b)
    return y_pred[0, :batch].reshape(batch, 1), loss[0, 0]


def model_forward(x, w, b, y=None):
    """Mirrors model.forward: sigmoid(Linear(x)); if y is given, returns MSE loss."""
    if y is not None:
        _, loss = linear_sigmoid_mse(x, y, w, b)
        return loss
    return linear_sigmoid(x, w, b)


if __name__ == "__main__":
    key = jax.random.PRNGKey(0)
    kx, kw, kb, ky = jax.random.split(key, 4)

    IN, OUT = 3, 1
    bound = 1.0 / jnp.sqrt(jnp.float32(IN))       # PyTorch Linear init range U(-1/sqrt(IN), 1/sqrt(IN))
    w = jax.random.uniform(kw, (IN,), jnp.float32, -bound, bound)
    b = jax.random.uniform(kb, (OUT,), jnp.float32, -bound, bound)

    B = 8
    x = jax.random.normal(kx, (B, IN), jnp.float32)
    y = jax.random.uniform(ky, (B, OUT), jnp.float32)

    # Forward path (y=None).
    y_pred = jax.block_until_ready(model_forward(x, w, b))
    ref = jax.nn.sigmoid(x @ w.reshape(IN, OUT) + b)
    assert y_pred.shape == (B, OUT)
    assert jnp.allclose(y_pred, ref, atol=1e-4, rtol=1e-4), "forward mismatch vs reference"

    # Loss path (y given) -- fused into one kernel.
    loss = jax.block_until_ready(model_forward(x, w, b, y))
    loss_ref = jnp.mean((ref - y) ** 2)
    assert jnp.allclose(loss, loss_ref, atol=1e-4, rtol=1e-4), "loss mismatch vs reference"

    # Multi-block path: tiny lane blocks so the grid, padding mask and accumulator are exercised.
    B2 = 600
    x2 = jax.random.normal(kx, (B2, IN), jnp.float32)
    y2 = jax.random.uniform(ky, (B2, OUT), jnp.float32)
    yp2, l2 = jax.block_until_ready(linear_sigmoid_mse(x2, y2, w, b, max_block_lanes=256))
    ref2 = jax.nn.sigmoid(x2 @ w.reshape(IN, OUT) + b)
    assert jnp.allclose(yp2, ref2, atol=1e-4, rtol=1e-4), "multi-block forward mismatch"
    assert jnp.allclose(l2, jnp.mean((ref2 - y2) ** 2), atol=1e-4, rtol=1e-4), "multi-block loss mismatch"

    print("KERNEL_OK")
</pallas_src>

<mosaic_0001>
module attributes {stable_mosaic.version = 11 : i64} {
  func.func @_fwd_kernel(%arg0: i32, %arg1: memref<3x128xf32, #tpu.memory_space<vmem>>, %arg2: memref<3xf32, #tpu.memory_space<smem>>, %arg3: memref<1xf32, #tpu.memory_space<smem>>, %arg4: memref<1x128xf32, #tpu.memory_space<vmem>>) attributes {dimension_semantics = [#tpu.dimension_semantics<parallel>], iteration_bounds = array<i64: 1>, scalar_prefetch = 0 : i64, scratch_operands = 0 : i64, tpu.core_type = #tpu.core_type<tc>, window_params = [{transform_indices = @transform_0, window_bounds = array<i64: 3, 128>}, {transform_indices = @transform_1, window_bounds = array<i64: 3>}, {transform_indices = @transform_2, window_bounds = array<i64: 1>}, {transform_indices = @transform_3, window_bounds = array<i64: 1, 128>}]} {
    %c0 = arith.constant 0 : index
    %c0_0 = arith.constant 0 : index
    %0 = vector.load %arg1[%c0, %c0_0] : memref<3x128xf32, #tpu.memory_space<vmem>>, vector<3x128xf32>
    %1 = vector.extract_strided_slice %0 {offsets = [0, 0], sizes = [1, 128], strides = [1, 1]} : vector<3x128xf32> to vector<1x128xf32>
    %c0_1 = arith.constant 0 : index
    %2 = memref.load %arg2[%c0_1] : memref<3xf32, #tpu.memory_space<smem>>
    %3 = vector.broadcast %2 : f32 to vector<1x128xf32>
    %4 = arith.mulf %1, %3 : vector<1x128xf32>
    %5 = vector.extract_strided_slice %0 {offsets = [1, 0], sizes = [1, 128], strides = [1, 1]} : vector<3x128xf32> to vector<1x128xf32>
    %c1 = arith.constant 1 : index
    %6 = memref.load %arg2[%c1] : memref<3xf32, #tpu.memory_space<smem>>
    %7 = vector.broadcast %6 : f32 to vector<1x128xf32>
    %8 = arith.mulf %5, %7 : vector<1x128xf32>
    %9 = arith.addf %4, %8 : vector<1x128xf32>
    %10 = vector.extract_strided_slice %0 {offsets = [2, 0], sizes = [1, 128], strides = [1, 1]} : vector<3x128xf32> to vector<1x128xf32>
    %c2 = arith.constant 2 : index
    %11 = memref.load %arg2[%c2] : memref<3xf32, #tpu.memory_space<smem>>
    %12 = vector.broadcast %11 : f32 to vector<1x128xf32>
    %13 = arith.mulf %10, %12 : vector<1x128xf32>
    %14 = arith.addf %9, %13 : vector<1x128xf32>
    %c0_2 = arith.constant 0 : index
    %15 = memref.load %arg3[%c0_2] : memref<1xf32, #tpu.memory_space<smem>>
    %16 = vector.broadcast %15 : f32 to vector<1x128xf32>
    %17 = arith.addf %14, %16 : vector<1x128xf32>
    %cst = arith.constant 0.000000e+00 : f32
    %18 = vector.broadcast %cst : f32 to vector<1x128xf32>
    %19 = arith.subf %18, %17 : vector<1x128xf32>
    %20 = math.exp %19 : vector<1x128xf32>
    %cst_3 = arith.constant 1.000000e+00 : f32
    %21 = vector.broadcast %cst_3 : f32 to vector<1x128xf32>
    %22 = arith.addf %21, %20 : vector<1x128xf32>
    %cst_4 = arith.constant 1.000000e+00 : f32
    %23 = vector.broadcast %cst_4 : f32 to vector<1x128xf32>
    %24 = arith.divf %23, %22 : vector<1x128xf32>
    %c0_5 = arith.constant 0 : index
    %c0_6 = arith.constant 0 : index
    %25 = vector.load %arg4[%c0_5, %c0_6] : memref<1x128xf32, #tpu.memory_space<vmem>>, vector<1x128xf32>
    tpu.vector_store %arg4[%c0_5, %c0_6], %24 {strides = array<i32>} : memref<1x128xf32, #tpu.memory_space<vmem>>, vector<1x128xf32>,
    return
  }
  func.func @transform_0(%arg0: i32) -> (i32, i32) {
    %c0_i32 = arith.constant 0 : i32
    %c0_i32_0 = arith.constant 0 : i32
    return %c0_i32, %arg0 : i32, i32
  }
  func.func @transform_1(%arg0: i32) -> i32 {
    %c0_i32 = arith.constant 0 : i32
    %c0_i32_0 = arith.constant 0 : i32
    return %c0_i32 : i32
  }
  func.func @transform_2(%arg0: i32) -> i32 {
    %c0_i32 = arith.constant 0 : i32
    %c0_i32_0 = arith.constant 0 : i32
    return %c0_i32 : i32
  }
  func.func @transform_3(%arg0: i32) -> (i32, i32) {
    %c0_i32 = arith.constant 0 : i32
    %c0_i32_0 = arith.constant 0 : i32
    return %c0_i32, %arg0 : i32, i32
  }
}

</mosaic_0001>

<llo_original>
// kernel: tpu_custom_call.1
$region0: #{tpu_custom_call.1}
  #allocation0 [shape = 'u32[]', space=smem, size = 0x4, offset = 0x4, fixed_abs, tag = 'smem constant byte address 0x4 - core index']
  #allocation1 [shape = 'u32[144,128]{1,0:T(1,128)}', space=vmem, size = 0x12000, scoped, tag = 'internal scratch']
  #allocation2 [shape = 'f32[1]{0:T(128)S(6)}', space=smem, size = 0x200, scoped, tag = 'scoped memory for tpu_custom_call.1']
  %s0 = inlined_call_operand.hbm [shape: f32[3,128], index: 0, kind: input, shape index: {}]
  %s1 = inlined_call_operand.vmem [shape: f32[3], index: 1, kind: input, shape index: {}]
  %s2 = inlined_call_operand.<no memory space> [shape: f32[1], index: 2, kind: input, shape index: {}]
  %s3 = inlined_call_operand.hbm [shape: f32[1,128], index: 3, kind: output, shape index: {}]
  %s4 = sld [smem:[#allocation0]]
  $region30: #{tpu_custom_call.1} parent=0
    _
  %s6 = ssub.s32 1, %s4
  %s7 = scalar_select 0, %s6, %s4
  %8 = sst [smem:[#allocation2]] %s2
  $region1: #{tpu_custom_call.1} parent=0
    #allocation3 [shape = 'u8[2048]{0}', space=vmem, size = 0x800, scoped, tag = 'input window, operand 0, single buffered']
    #allocation4 [shape = 's32[1]{0}', space=sflag, size = 0x4, scoped, tag = 'scoped memory for tpu_custom_call.1']
    #allocation5 [shape = 's32[1]{0}', space=sflag, size = 0x4, scoped, tag = 'scoped memory for tpu_custom_call.1']
    #allocation6 [shape = 's32[1]{0}', space=sflag, size = 0x4, scoped, tag = 'scoped memory for tpu_custom_call.1']
    #allocation7 [shape = 'u8[512]{0}', space=smem, size = 0x200, scoped, tag = 'input window, operand 1, single buffered']
    #allocation8 [shape = 'u8[512]{0}', space=vmem, size = 0x400, scoped, tag = 'output window, operand 0, single buffered']
    %9 = vsyncpa [#allocation4], 0
    %10 = vsyncpa [#allocation6], 0
    %11 = vsyncpa [#allocation5], 0
    // Predicated region
    $region2: #{tpu_custom_call.1} parent=1 // pred_check
      _
    $region3: #{tpu_custom_call.1} parent=1 // pred_check_branch
      %13 = sbr.rel (0) target = $region5
    $region4: #{tpu_custom_call.1} parent=1 // pred_region
      %s15 = ssub.s32 64, 64
      %16 = vsyncadd [#allocation4], %s15
      %s18 = sshll.u32 [#allocation3], 4
      %s19 = int_to_ptr.vmem [resolvable:$true] %s18
      %21 = dma.hbm_to_vmem [thread:$0]  %s0, 64, %s19, [#allocation4]
    $region5: #{tpu_custom_call.1} parent=1 // pred_fallthru
      _
    // Predicated region
    $region6: #{tpu_custom_call.1} parent=1 // pred_check
      _
    $region7: #{tpu_custom_call.1} parent=1 // pred_check_branch
      %23 = sbr.rel (0) target = $region9
    $region8: #{tpu_custom_call.1} parent=1 // pred_region
      %s25 = ssub.s32 16, 16
      %26 = vsyncadd [#allocation6], %s25
      %s28 = sshll.u32 %s1, 4
      %s29 = int_to_ptr.vmem [resolvable:$true] %s28
      %31 = dma.vmem_to_smem %s29, 16, [#allocation7], [#allocation6]
    $region9: #{tpu_custom_call.1} parent=1 // pred_fallthru
      _
    // Predicated region
    $region10: #{tpu_custom_call.1} parent=1 // pred_check
      _
    $region11: #{tpu_custom_call.1} parent=1 // pred_check_branch
      %33 = sbr.rel (0) target = $region13
    $region12: #{tpu_custom_call.1} parent=1 // pred_region
      _
    $region13: #{tpu_custom_call.1} parent=1 // pred_fallthru
      _
    // Predicated region
    $region14: #{tpu_custom_call.1} parent=1 // pred_check
      _
    $region15: #{tpu_custom_call.1} parent=1 // pred_check_branch
      %35 = sbr.rel (0) target = $region17
    $region16: #{tpu_custom_call.1} parent=1 // pred_region
      %36 = dma.done [#allocation4], 64
    $region17: #{tpu_custom_call.1} parent=1 // pred_fallthru
      _
    // Predicated region
    $region18: #{tpu_custom_call.1} parent=1 // pred_check
      _
    $region19: #{tpu_custom_call.1} parent=1 // pred_check_branch
      %38 = sbr.rel (0) target = $region21
    $region20: #{tpu_custom_call.1} parent=1 // pred_region
      %39 = dma.done [#allocation6], 16
    $region21: #{tpu_custom_call.1} parent=1 // pred_fallthru
      _
    %40 = sfence
    %v41 = vld [vmem:[#allocation3] sm:$0x7]
    %s42 = sld [smem:[#allocation7]]
    %v43 = vstv %s42
    %v44 = vmul.f32 %v41, %v43
    %s45 = sld [smem:[#allocation7 + $0x1]]
    %v46 = vstv %s45
    %v47 = vmul.f32 %v41, %v46
    %v49 = vrot.slane %v47, 1
    %v51 = vadd.f32 %v44, %v49
    %s52 = sld [smem:[#allocation7 + $0x2]]
    %v53 = vstv %s52
    %v54 = vmul.f32 %v41, %v53
    %v56 = vrot.slane %v54, 2
    %v58 = vadd.f32 %v51, %v56
    %s59 = sld [smem:[#allocation2]]
    %v60 = vstv %s59
    %v61 = vadd.f32 %v58, %v60
    %v62 = vsub.f32 0.0, %v61
    %v63 = vmul.f32 %v62, 1.442695
    %v64 = vpow.pop %v63
    %v65 = vadd.f32 %v64, 1.0
    %v66 = vrcp.pop %v65
    %v67 = vmul.f32 1.0, %v66
    %68 = vst [vmem:[#allocation8] sm:$0x1] %v67
    // Predicated region
    $region22: #{tpu_custom_call.1} parent=1 // pred_check
      _
    $region23: #{tpu_custom_call.1} parent=1 // pred_check_branch
      %70 = sbr.rel (0) target = $region25
    $region24: #{tpu_custom_call.1} parent=1 // pred_region
      %s72 = ssub.s32 16, 16
      %73 = vsyncadd [#allocation5], %s72
      %s75 = sshll.u32 [#allocation8], 4
      %s76 = int_to_ptr.vmem [resolvable:$true] %s75
      %78 = dma.vmem_to_hbm [thread:$0]  %s76, 16, %s3, [#allocation5]
    $region25: #{tpu_custom_call.1} parent=1 // pred_fallthru
      _
    // Predicated region
    $region26: #{tpu_custom_call.1} parent=1 // pred_check
      _
    $region27: #{tpu_custom_call.1} parent=1 // pred_check_branch
      %80 = sbr.rel (0) target = $region29
    $region28: #{tpu_custom_call.1} parent=1 // pred_region
      %81 = dma.done [#allocation5], 16
    $region29: #{tpu_custom_call.1} parent=1 // pred_fallthru
      _
    %82 = vsyncpa [#allocation4], 1
    %83 = vsyncpa [#allocation5], 1
    %84 = vsyncpa [#allocation6], 1

</llo_original>
